<compile_context>
chip_gen: v6e
topology: v6e:2x2x1
jax: 0.10.0
libtpu: 0.0.40
codegen_flags: <defaults>
</compile_context>

<pallas_src>
from functools import partial

import jax
import jax.numpy as jnp
import numpy as np
from jax import lax
from jax.experimental import pallas as pl
from jax.experimental.pallas import tpu as pltpu


# ----------------------------------------------------------------------------
# Kernel
# ----------------------------------------------------------------------------
def _context_gen_kernel(x_ref, wjb_ref, wjs_ref, bnb_ref, wf_ref, bf_ref,
                        wt_ref, bt_ref, hc_ref, gcf_ref, gct_ref,
                        cf_acc, hc_acc, *, total_t, mask_tail):
    # Grid: (batch blocks [parallel], T blocks [arbitrary, innermost]).
    t = pl.program_id(1)
    nt = pl.num_programs(1)
    NB, Cin, F, TB = x_ref.shape

    @pl.when(t == 0)
    def _():
        cf_acc[...] = jnp.zeros_like(cf_acc)
        hc_acc[...] = jnp.zeros_like(hc_acc)

    wjb = wjb_ref[...]                     # (Cd, Cin*F): BN scale & 1/F folded in
    bnb = bnb_ref[...]                     # (Cd, 1)     BN bias
    wt = wt_ref[...]                       # (Ce, Cd)
    bt = bt_ref[...]                       # (Ce, 1)

    def hardswish(v):
        return v * jnp.clip(v + 3.0, 0.0, 6.0) * (1.0 / 6.0)

    # Column-validity mask, only materialized when T % TB != 0 (padded tail
    # block: OOB x columns are stale VMEM and must not reach cf / h_c).
    if mask_tail:
        col = t * TB + lax.broadcasted_iota(jnp.int32, (1, TB), 1)
        col_ok = col < total_t                       # (1, TB)
        col_ok3 = col_ok[None]                       # (1, 1, TB)

    # ---- time branch + cf accumulation, streamed per batch element ----------
    def time_body(n, carry):
        x_n = x_ref[n]                               # (Cin, F, TB), T on lanes
        if mask_tail:
            x_n = jnp.where(col_ok3, x_n, 0.0)
        # cf running sum over T blocks (lane reduce; hidden under the x DMA).
        cf_acc[n] = cf_acc[n] + jnp.sum(x_n, axis=2)             # (Cin, F)
        # joint conv + BN + hardswish with the F-mean fused into the weight:
        # one MXU matmul over the Cin*F contraction (leading-dim merge is free).
        j_t = hardswish(
            jnp.dot(wjb, x_n.reshape(Cin * F, TB),
                    preferred_element_type=jnp.float32) + bnb)   # (Cd, TB)
        j_hc = jnp.where(col_ok, j_t, 0.0) if mask_tail else j_t
        hc_acc[n] = hc_acc[n] + jnp.sum(j_hc, axis=1, keepdims=True)  # (Cd, 1)
        gct_ref[n] = jnp.dot(wt, j_t, preferred_element_type=jnp.float32) + bt
        return carry

    lax.fori_loop(0, NB, time_body, 0, unroll=True)

    # ---- freq branch + h_c: needs the full mean over T -> last T block only --
    @pl.when(t == nt - 1)
    def _():
        wjs = wjs_ref[...]                           # (Cd, Cin), BN scale folded
        wf = wf_ref[...]                             # (Ce, Cd)
        bf = bf_ref[...]                             # (Ce, 1)
        inv_t = 1.0 / total_t
        inv_ft = 1.0 / (F + total_t)

        def freq_body(n, carry):
            cf_n = cf_acc[n] * inv_t                                  # (Cin, F)
            j_f = hardswish(
                jnp.dot(wjs, cf_n, preferred_element_type=jnp.float32) + bnb)
            gcf_ref[n] = jnp.dot(wf, j_f, preferred_element_type=jnp.float32) + bf
            hc_ref[n] = (hc_acc[n] + jnp.sum(j_f, axis=1, keepdims=True)) * inv_ft
            return carry

        lax.fori_loop(0, NB, freq_body, 0, unroll=True)


# ----------------------------------------------------------------------------
# Tiling heuristics (generation-aware)
# ----------------------------------------------------------------------------
def _vmem_capacity_bytes():
    try:
        cap = int(pltpu.get_tpu_info().vmem_capacity_bytes)
        if cap > 0:
            return cap
    except Exception:
        pass
    return 64 * 1024 * 1024          # conservative fallback (v7x-sized)


def _padded_bytes(shape, itemsize=4):
    """f32 bytes after Mosaic (8,128) padding of the last two dims."""
    s = list(shape)
    if len(s) == 1:
        s = [1] + s
    s[-1] = -(-s[-1] // 128) * 128
    s[-2] = -(-s[-2] // 8) * 8
    n = 1
    for d in s:
        n *= d
    return n * itemsize


def _choose_tiles(N, Cin, F, T, Cd, Ce, vmem_limit_bytes, two_cores):
    """Pick (NB, TB): batch elements per grid step and T tile size.

    Preference: full-T blocks (contiguous DMA, nt=1); otherwise lane-aligned
    TB >= 512.  NB divides N, is capped at N//2 only on two-TensorCore parts,
    and is chosen so NB*TB <= 4096 where possible (live-range sanity).
    """
    def est(nb, tb):
        x_blk = _padded_bytes((nb, Cin, F, tb))
        w_blk = (_padded_bytes((Cd, Cin * F)) + _padded_bytes((Cd, Cin))
                 + _padded_bytes((Cd, 1))
                 + 2 * (_padded_bytes((Ce, Cd)) + _padded_bytes((Ce, 1))))
        out_blk = (_padded_bytes((nb, Cd, 1)) + _padded_bytes((nb, Ce, F))
                   + _padded_bytes((nb, Ce, tb)))
        scratch = _padded_bytes((nb, Cin, F)) + _padded_bytes((nb, Cd, 1))
        # in-kernel temporaries (possible x slice copy, j_t, g_ct values) plus
        # slack for Mosaic internal scratch.
        temps = (_padded_bytes((Cin * F, tb)) + _padded_bytes((Cd, tb))
                 + _padded_bytes((Ce, tb)))
        return 2 * (x_blk + w_blk + out_blk) + scratch + temps + (2 << 20)

    budget = int(vmem_limit_bytes * 0.8)
    nb_max = max(1, N // 2) if two_cores else N
    divisors = [d for d in range(1, N + 1) if N % d == 0]

    def best_nb(tb):
        cands = [d for d in divisors if d <= nb_max and d * tb <= 4096]
        if not cands:
            cands = [1]
        for nb in sorted(cands, reverse=True):
            if est(nb, tb) <= budget:
                return nb
        return None

    # 1) Full-T block (nt == 1): fully contiguous x DMA, no accumulator pass.
    nb = best_nb(T)
    if nb is not None:
        return nb, T
    # 2) Stream over T with DMA-efficient lane-aligned tiles (>= 2 KiB rows).
    tb = min((T // 128) * 128, 4096)
    while tb >= 512:
        nb = best_nb(tb)
        if nb is not None:
            return nb, tb
        tb -= 128
    # 3) Last resort: small aligned tiles.
    for tb in (384, 256, 128):
        nb = best_nb(tb)
        if nb is not None:
            return nb, tb
    return 1, 128


# ----------------------------------------------------------------------------
# Wrapper
# ----------------------------------------------------------------------------
def context_gen_forward(x_nchw, params):
    """ContextGen.forward (stride=1) on NCHW input.

    x_nchw: (N, Cin, F, T) float32.
    Returns PyTorch-layout outputs:
      h_c (N, Cd, 1, 1), g_cf (N, Ce, F, 1), g_ct (N, Ce, 1, T).
    """
    N, Cin, F, T = x_nchw.shape
    wj = params["wj"]                     # (Cd, Cin)   joint_conv weight
    wf = params["wf"]                     # (Ce, Cd)    conv_f weight
    wt = params["wt"]                     # (Ce, Cd)    conv_t weight
    Cd = wj.shape[0]
    Ce = wf.shape[0]

    # Fold eval-mode BN scale into the joint-conv weight, and additionally fold
    # the F-mean (time branch) into a "big" weight over the Cin*F contraction.
    wj_s = wj * params["bn_scale"][:, None]                 # (Cd, Cin)
    wj_big = jnp.repeat(wj_s, F, axis=1) * (1.0 / F)        # (Cd, Cin*F)
    bnb = params["bn_bias"][:, None]                        # (Cd, 1)
    bf = params["bf"][:, None]                              # (Ce, 1)
    bt = params["bt"][:, None]                              # (Ce, 1)

    vmem_cap = _vmem_capacity_bytes()
    vmem_limit = max(32 * 1024 * 1024,
                     min((3 * vmem_cap) // 4, 100 * 1024 * 1024))
    # Two-TensorCore heuristic (v7x): 64 MiB VMEM parts split the "parallel"
    # batch axis across cores, so keep >= 2 grid points on it.
    two_cores = vmem_cap <= 64 * 1024 * 1024

    NB, TB = _choose_tiles(N, Cin, F, T, Cd, Ce, vmem_limit, two_cores)
    assert N % NB == 0
    nt = pl.cdiv(T, TB)
    mask_tail = (nt * TB != T)

    grid_spec = pltpu.PrefetchScalarGridSpec(
        num_scalar_prefetch=0,
        grid=(N // NB, nt),                            # batch parallel, T arbitrary
        in_specs=[
            pl.BlockSpec((NB, Cin, F, TB), lambda n, t: (n, 0, 0, t)),  # x (NCHW)
            pl.BlockSpec((Cd, Cin * F), lambda n, t: (0, 0)),           # wj_big
            pl.BlockSpec((Cd, Cin), lambda n, t: (0, 0)),               # wj*scale
            pl.BlockSpec((Cd, 1), lambda n, t: (0, 0)),                 # BN bias
            pl.BlockSpec((Ce, Cd), lambda n, t: (0, 0)),                # wf
            pl.BlockSpec((Ce, 1), lambda n, t: (0, 0)),                 # bf
            pl.BlockSpec((Ce, Cd), lambda n, t: (0, 0)),                # wt
            pl.BlockSpec((Ce, 1), lambda n, t: (0, 0)),                 # bt
        ],
        out_specs=[
            pl.BlockSpec((NB, Cd, 1), lambda n, t: (n, 0, 0)),          # h_c
            pl.BlockSpec((NB, Ce, F), lambda n, t: (n, 0, 0)),          # g_cf (F lanes)
            pl.BlockSpec((NB, Ce, TB), lambda n, t: (n, 0, t)),         # g_ct (T lanes)
        ],
        scratch_shapes=[
            pltpu.VMEM((NB, Cin, F), jnp.float32),     # cf running sum over T blocks
            pltpu.VMEM((NB, Cd, 1), jnp.float32),      # h_c running sum (time branch)
        ],
    )

    h_c, g_cf, g_ct = pl.pallas_call(
        partial(_context_gen_kernel, total_t=T, mask_tail=mask_tail),
        out_shape=(
            jax.ShapeDtypeStruct((N, Cd, 1), jnp.float32),
            jax.ShapeDtypeStruct((N, Ce, F), jnp.float32),
            jax.ShapeDtypeStruct((N, Ce, T), jnp.float32),
        ),
        grid_spec=grid_spec,
        compiler_params=pltpu.CompilerParams(
            dimension_semantics=("parallel", "arbitrary"),
            vmem_limit_bytes=vmem_limit,
        ),
    )(x_nchw, wj_big, wj_s, bnb, wf, bf, wt, bt)

    # Pure reshapes back to PyTorch layouts (no transposes, no extra HBM pass).
    h_c_pt = h_c[:, :, :, None]                        # (N, Cd, 1, 1)
    g_cf_pt = g_cf[:, :, :, None]                      # (N, Ce, F, 1)
    g_ct_pt = g_ct[:, :, None, :]                      # (N, Ce, 1, T)
    return h_c_pt, g_cf_pt, g_ct_pt


# ----------------------------------------------------------------------------
# Plain-JAX reference of the PyTorch module (NCHW, stride=1)
# ----------------------------------------------------------------------------
def _reference_forward(x, params):
    wj = params["wj"]
    wf = params["wf"]
    wt = params["wt"]
    scale = params["bn_scale"]
    bias = params["bn_bias"]
    bf = params["bf"]
    bt = params["bt"]

    N, Cin, F, T = x.shape
    cf = jnp.mean(x, axis=3, keepdims=True)                               # (N,Cin,F,1)
    ct = jnp.transpose(jnp.mean(x, axis=2, keepdims=True), (0, 1, 3, 2))  # (N,Cin,T,1)
    g_cat = jnp.concatenate([cf, ct], axis=2)                             # (N,Cin,F+T,1)
    j = jnp.einsum("nchw,oc->nohw", g_cat, wj)
    j = j * scale[None, :, None, None] + bias[None, :, None, None]
    j = j * jnp.clip(j + 3.0, 0.0, 6.0) / 6.0
    h_cf, h_ct = j[:, :, :F], j[:, :, F:]
    h_ct = jnp.transpose(h_ct, (0, 1, 3, 2))                              # (N,Cd,1,T)
    h_c = jnp.mean(j, axis=2, keepdims=True)                              # (N,Cd,1,1)
    g_cf = jnp.einsum("nchw,oc->nohw", h_cf, wf) + bf[None, :, None, None]
    g_ct = jnp.einsum("nchw,oc->nohw", h_ct, wt) + bt[None, :, None, None]
    return h_c, g_cf, g_ct


if __name__ == "__main__":
    # Small, module-consistent shapes
    N, Cin, F, T = 2, 4, 16, 16        # batch, in_ch, freq, time
    Cd, Ce = 8, 16                     # context_dim, exp_ch

    key = jax.random.PRNGKey(0)
    keys = jax.random.split(key, 10)

    x = jax.random.normal(keys[0], (N, Cin, F, T), dtype=jnp.float32)

    # Deterministic synthetic parameters (no checkpoint load)
    wj = jax.random.normal(keys[1], (Cd, Cin), dtype=jnp.float32) * 0.1   # joint_conv
    gamma = 1.0 + 0.1 * jax.random.normal(keys[2], (Cd,), dtype=jnp.float32)
    beta = 0.1 * jax.random.normal(keys[3], (Cd,), dtype=jnp.float32)
    run_mean = 0.05 * jax.random.normal(keys[4], (Cd,), dtype=jnp.float32)
    run_var = jnp.abs(1.0 + 0.1 * jax.random.normal(keys[5], (Cd,), dtype=jnp.float32))
    eps = 1e-5
    bn_scale = gamma / jnp.sqrt(run_var + eps)
    bn_bias = beta - run_mean * bn_scale

    wf = jax.random.normal(keys[6], (Ce, Cd), dtype=jnp.float32) * 0.1    # conv_f
    bf = 0.1 * jax.random.normal(keys[7], (Ce,), dtype=jnp.float32)
    wt = jax.random.normal(keys[8], (Ce, Cd), dtype=jnp.float32) * 0.1    # conv_t
    bt = 0.1 * jax.random.normal(keys[9], (Ce,), dtype=jnp.float32)

    params = {
        "wj": wj,                # (Cd, Cin)
        "bn_scale": bn_scale,    # (Cd,)
        "bn_bias": bn_bias,      # (Cd,)
        "wf": wf,                # (Ce, Cd)
        "bf": bf,                # (Ce,)
        "wt": wt,                # (Ce, Cd)
        "bt": bt,                # (Ce,)
    }

    h_c, g_cf, g_ct = jax.jit(context_gen_forward)(x, params)
    jax.block_until_ready((h_c, g_cf, g_ct))

    # Verify against the plain-JAX reference of the PyTorch forward
    r_hc, r_gcf, r_gct = _reference_forward(x, params)
    np.testing.assert_allclose(np.asarray(h_c), np.asarray(r_hc), rtol=1e-5, atol=1e-5)
    np.testing.assert_allclose(np.asarray(g_cf), np.asarray(r_gcf), rtol=1e-5, atol=1e-5)
    np.testing.assert_allclose(np.asarray(g_ct), np.asarray(r_gct), rtol=1e-5, atol=1e-5)

    assert h_c.shape == (N, Cd, 1, 1)
    assert g_cf.shape == (N, Ce, F, 1)
    assert g_ct.shape == (N, Ce, 1, T)

    print("KERNEL_OK")
</pallas_src>

<mosaic_0001>
module attributes {stable_mosaic.version = 11 : i64} {
  func.func @_context_gen_kernel(%arg0: i32, %arg1: i32, %arg2: memref<1x4x16x16xf32, #tpu.memory_space<vmem>>, %arg3: memref<8x64xf32, #tpu.memory_space<vmem>>, %arg4: memref<8x4xf32, #tpu.memory_space<vmem>>, %arg5: memref<8x1xf32, #tpu.memory_space<vmem>>, %arg6: memref<16x8xf32, #tpu.memory_space<vmem>>, %arg7: memref<16x1xf32, #tpu.memory_space<vmem>>, %arg8: memref<16x8xf32, #tpu.memory_space<vmem>>, %arg9: memref<16x1xf32, #tpu.memory_space<vmem>>, %arg10: memref<1x8x1xf32, #tpu.memory_space<vmem>>, %arg11: memref<1x16x16xf32, #tpu.memory_space<vmem>>, %arg12: memref<1x16x16xf32, #tpu.memory_space<vmem>>, %arg13: memref<1x4x16xf32, #tpu.memory_space<vmem>>, %arg14: memref<1x8x1xf32, #tpu.memory_space<vmem>>) attributes {dimension_semantics = [#tpu.dimension_semantics<parallel>, #tpu.dimension_semantics<arbitrary>], iteration_bounds = array<i64: 2, 1>, scalar_prefetch = 0 : i64, scratch_operands = 2 : i64, tpu.core_type = #tpu.core_type<tc>, window_params = [{transform_indices = @transform_0, window_bounds = array<i64: 1, 4, 16, 16>}, {pipeline_mode = #tpu.pipeline_mode<synchronous>, transform_indices = @transform_1, window_bounds = array<i64: 8, 64>}, {pipeline_mode = #tpu.pipeline_mode<synchronous>, transform_indices = @transform_2, window_bounds = array<i64: 8, 4>}, {pipeline_mode = #tpu.pipeline_mode<synchronous>, transform_indices = @transform_3, window_bounds = array<i64: 8, 1>}, {pipeline_mode = #tpu.pipeline_mode<synchronous>, transform_indices = @transform_4, window_bounds = array<i64: 16, 8>}, {pipeline_mode = #tpu.pipeline_mode<synchronous>, transform_indices = @transform_5, window_bounds = array<i64: 16, 1>}, {pipeline_mode = #tpu.pipeline_mode<synchronous>, transform_indices = @transform_6, window_bounds = array<i64: 16, 8>}, {pipeline_mode = #tpu.pipeline_mode<synchronous>, transform_indices = @transform_7, window_bounds = array<i64: 16, 1>}, {transform_indices = @transform_8, window_bounds = array<i64: 1, 8, 1>}, {transform_indices = @transform_9, window_bounds = array<i64: 1, 16, 16>}, {transform_indices = @transform_10, window_bounds = array<i64: 1, 16, 16>}]} {
    %c0_i32 = arith.constant 0 : i32
    %0 = arith.cmpi eq, %arg1, %c0_i32 : i32
    %1 = arith.extui %0 : i1 to i32
    %c0_i32_0 = arith.constant 0 : i32
    %2 = arith.cmpi ne, %1, %c0_i32_0 : i32
    scf.if %2 {
      %cst_31 = arith.constant 0.000000e+00 : f32
      %52 = vector.broadcast %cst_31 : f32 to vector<1x4x16xf32>
      %c0_32 = arith.constant 0 : index
      %c0_33 = arith.constant 0 : index
      %c0_34 = arith.constant 0 : index
      %53 = vector.load %arg13[%c0_32, %c0_33, %c0_34] : memref<1x4x16xf32, #tpu.memory_space<vmem>>, vector<1x4x16xf32>
      tpu.vector_store %arg13[%c0_32, %c0_33, %c0_34], %52 {strides = array<i32>} : memref<1x4x16xf32, #tpu.memory_space<vmem>>, vector<1x4x16xf32>,
      %cst_35 = arith.constant 0.000000e+00 : f32
      %54 = vector.broadcast %cst_35 : f32 to vector<1x8x1xf32>
      %c0_36 = arith.constant 0 : index
      %c0_37 = arith.constant 0 : index
      %c0_38 = arith.constant 0 : index
      %55 = vector.load %arg14[%c0_36, %c0_37, %c0_38] : memref<1x8x1xf32, #tpu.memory_space<vmem>>, vector<1x8x1xf32>
      tpu.vector_store %arg14[%c0_36, %c0_37, %c0_38], %54 {strides = array<i32>} : memref<1x8x1xf32, #tpu.memory_space<vmem>>, vector<1x8x1xf32>,
    } else {
    }
    %c0 = arith.constant 0 : index
    %c0_1 = arith.constant 0 : index
    %3 = vector.load %arg3[%c0, %c0_1] : memref<8x64xf32, #tpu.memory_space<vmem>>, vector<8x64xf32>
    %c0_2 = arith.constant 0 : index
    %c0_3 = arith.constant 0 : index
    %4 = vector.load %arg5[%c0_2, %c0_3] : memref<8x1xf32, #tpu.memory_space<vmem>>, vector<8x1xf32>
    %c0_4 = arith.constant 0 : index
    %c0_5 = arith.constant 0 : index
    %5 = vector.load %arg8[%c0_4, %c0_5] : memref<16x8xf32, #tpu.memory_space<vmem>>, vector<16x8xf32>
    %c0_6 = arith.constant 0 : index
    %c0_7 = arith.constant 0 : index
    %6 = vector.load %arg9[%c0_6, %c0_7] : memref<16x1xf32, #tpu.memory_space<vmem>>, vector<16x1xf32>
    %c0_i32_8 = arith.constant 0 : i32
    %7 = arith.index_cast %c0_i32_8 : i32 to index
    %c0_9 = arith.constant 0 : index
    %c0_10 = arith.constant 0 : index
    %c0_11 = arith.constant 0 : index
    %8 = vector.load %arg2[%7, %c0_9, %c0_10, %c0_11] : memref<1x4x16x16xf32, #tpu.memory_space<vmem>>, vector<1x4x16x16xf32>
    %9 = vector.shape_cast %8 : vector<1x4x16x16xf32> to vector<4x16x16xf32>
    %10 = arith.index_cast %c0_i32_8 : i32 to index
    %c0_12 = arith.constant 0 : index
    %c0_13 = arith.constant 0 : index
    %11 = vector.load %arg13[%10, %c0_12, %c0_13] : memref<1x4x16xf32, #tpu.memory_space<vmem>>, vector<1x4x16xf32>
    %12 = vector.shape_cast %11 : vector<1x4x16xf32> to vector<4x16xf32>
    %cst = arith.constant dense<0.000000e+00> : vector<4x16xf32>
    %13 = vector.multi_reduction <add>, %9, %cst [2] : vector<4x16x16xf32> to vector<4x16xf32>
    %14 = arith.addf %12, %13 : vector<4x16xf32>
    %15 = arith.index_cast %c0_i32_8 : i32 to index
    %c0_14 = arith.constant 0 : index
    %c0_15 = arith.constant 0 : index
    %16 = vector.load %arg13[%15, %c0_14, %c0_15] : memref<1x4x16xf32, #tpu.memory_space<vmem>>, vector<1x4x16xf32>
    %17 = vector.shape_cast %16 : vector<1x4x16xf32> to vector<4x16xf32>
    %18 = vector.shape_cast %14 : vector<4x16xf32> to vector<1x4x16xf32>
    tpu.vector_store %arg13[%15, %c0_14, %c0_15], %18 {strides = array<i32>} : memref<1x4x16xf32, #tpu.memory_space<vmem>>, vector<1x4x16xf32>,
    %19 = vector.shape_cast %9 : vector<4x16x16xf32> to vector<64x16xf32>
    %cst_16 = arith.constant dense<0.000000e+00> : vector<8x16xf32>
    %20 = tpu.matmul %3, %19, %cst_16 {dimension_numbers = #tpu.dot_dimension_numbers<[1], [0], [0], [1], [0, 0, 1, 1], [], []>} : vector<8x64xf32>, vector<64x16xf32>, vector<8x16xf32> -> vector<8x16xf32>
    %21 = vector.broadcast %4 : vector<8x1xf32> to vector<8x16xf32>
    %22 = arith.addf %20, %21 : vector<8x16xf32>
    %cst_17 = arith.constant 3.000000e+00 : f32
    %23 = vector.broadcast %cst_17 : f32 to vector<8x16xf32>
    %24 = arith.addf %22, %23 : vector<8x16xf32>
    %cst_18 = arith.constant 0.000000e+00 : f32
    %cst_19 = arith.constant 6.000000e+00 : f32
    %25 = vector.broadcast %cst_18 : f32 to vector<8x16xf32>
    %26 = arith.maximumf %25, %24 : vector<8x16xf32>
    %27 = vector.broadcast %cst_19 : f32 to vector<8x16xf32>
    %28 = arith.minimumf %27, %26 : vector<8x16xf32>
    %29 = arith.mulf %22, %28 : vector<8x16xf32>
    %cst_20 = arith.constant 0.166666672 : f32
    %30 = vector.broadcast %cst_20 : f32 to vector<8x16xf32>
    %31 = arith.mulf %29, %30 : vector<8x16xf32>
    %32 = arith.index_cast %c0_i32_8 : i32 to index
    %c0_21 = arith.constant 0 : index
    %c0_22 = arith.constant 0 : index
    %33 = vector.load %arg14[%32, %c0_21, %c0_22] : memref<1x8x1xf32, #tpu.memory_space<vmem>>, vector<1x8x1xf32>
    %34 = vector.shape_cast %33 : vector<1x8x1xf32> to vector<8x1xf32>
    %cst_23 = arith.constant dense<0.000000e+00> : vector<8xf32>
    %35 = vector.multi_reduction <add>, %31, %cst_23 [1] : vector<8x16xf32> to vector<8xf32>
    %36 = vector.shape_cast %35 : vector<8xf32> to vector<8x1xf32>
    %37 = arith.addf %34, %36 : vector<8x1xf32>
    %38 = arith.index_cast %c0_i32_8 : i32 to index
    %c0_24 = arith.constant 0 : index
    %c0_25 = arith.constant 0 : index
    %39 = vector.load %arg14[%38, %c0_24, %c0_25] : memref<1x8x1xf32, #tpu.memory_space<vmem>>, vector<1x8x1xf32>
    %40 = vector.shape_cast %39 : vector<1x8x1xf32> to vector<8x1xf32>
    %41 = vector.shape_cast %37 : vector<8x1xf32> to vector<1x8x1xf32>
    tpu.vector_store %arg14[%38, %c0_24, %c0_25], %41 {strides = array<i32>} : memref<1x8x1xf32, #tpu.memory_space<vmem>>, vector<1x8x1xf32>,
    %cst_26 = arith.constant dense<0.000000e+00> : vector<16x16xf32>
    %42 = tpu.matmul %5, %31, %cst_26 {dimension_numbers = #tpu.dot_dimension_numbers<[1], [0], [0], [1], [0, 0, 1, 1], [], []>} : vector<16x8xf32>, vector<8x16xf32>, vector<16x16xf32> -> vector<16x16xf32>
    %43 = vector.broadcast %6 : vector<16x1xf32> to vector<16x16xf32>
    %44 = arith.addf %42, %43 : vector<16x16xf32>
    %45 = arith.index_cast %c0_i32_8 : i32 to index
    %c0_27 = arith.constant 0 : index
    %c0_28 = arith.constant 0 : index
    %46 = vector.load %arg12[%45, %c0_27, %c0_28] : memref<1x16x16xf32, #tpu.memory_space<vmem>>, vector<1x16x16xf32>
    %47 = vector.shape_cast %46 : vector<1x16x16xf32> to vector<16x16xf32>
    %48 = vector.shape_cast %44 : vector<16x16xf32> to vector<1x16x16xf32>
    tpu.vector_store %arg12[%45, %c0_27, %c0_28], %48 {strides = array<i32>} : memref<1x16x16xf32, #tpu.memory_space<vmem>>, vector<1x16x16xf32>,
    %c1_i32 = arith.constant 1 : i32
    %c0_i32_29 = arith.constant 0 : i32
    %49 = arith.cmpi eq, %arg1, %c0_i32_29 : i32
    %50 = arith.extui %49 : i1 to i32
    %c0_i32_30 = arith.constant 0 : i32
    %51 = arith.cmpi ne, %50, %c0_i32_30 : i32
    scf.if %51 {
      %c0_31 = arith.constant 0 : index
      %c0_32 = arith.constant 0 : index
      %52 = vector.load %arg4[%c0_31, %c0_32] : memref<8x4xf32, #tpu.memory_space<vmem>>, vector<8x4xf32>
      %c0_33 = arith.constant 0 : index
      %c0_34 = arith.constant 0 : index
      %53 = vector.load %arg6[%c0_33, %c0_34] : memref<16x8xf32, #tpu.memory_space<vmem>>, vector<16x8xf32>
      %c0_35 = arith.constant 0 : index
      %c0_36 = arith.constant 0 : index
      %54 = vector.load %arg7[%c0_35, %c0_36] : memref<16x1xf32, #tpu.memory_space<vmem>>, vector<16x1xf32>
      %c0_i32_37 = arith.constant 0 : i32
      %55 = arith.index_cast %c0_i32_37 : i32 to index
      %c0_38 = arith.constant 0 : index
      %c0_39 = arith.constant 0 : index
      %56 = vector.load %arg13[%55, %c0_38, %c0_39] : memref<1x4x16xf32, #tpu.memory_space<vmem>>, vector<1x4x16xf32>
      %57 = vector.shape_cast %56 : vector<1x4x16xf32> to vector<4x16xf32>
      %cst_40 = arith.constant 6.250000e-02 : f32
      %58 = vector.broadcast %cst_40 : f32 to vector<4x16xf32>
      %59 = arith.mulf %57, %58 : vector<4x16xf32>
      %cst_41 = arith.constant dense<0.000000e+00> : vector<8x16xf32>
      %60 = tpu.matmul %52, %59, %cst_41 {dimension_numbers = #tpu.dot_dimension_numbers<[1], [0], [0], [1], [0, 0, 1, 1], [], []>} : vector<8x4xf32>, vector<4x16xf32>, vector<8x16xf32> -> vector<8x16xf32>
      %61 = vector.broadcast %4 : vector<8x1xf32> to vector<8x16xf32>
      %62 = arith.addf %60, %61 : vector<8x16xf32>
      %cst_42 = arith.constant 3.000000e+00 : f32
      %63 = vector.broadcast %cst_42 : f32 to vector<8x16xf32>
      %64 = arith.addf %62, %63 : vector<8x16xf32>
      %cst_43 = arith.constant 0.000000e+00 : f32
      %cst_44 = arith.constant 6.000000e+00 : f32
      %65 = vector.broadcast %cst_43 : f32 to vector<8x16xf32>
      %66 = arith.maximumf %65, %64 : vector<8x16xf32>
      %67 = vector.broadcast %cst_44 : f32 to vector<8x16xf32>
      %68 = arith.minimumf %67, %66 : vector<8x16xf32>
      %69 = arith.mulf %62, %68 : vector<8x16xf32>
      %cst_45 = arith.constant 0.166666672 : f32
      %70 = vector.broadcast %cst_45 : f32 to vector<8x16xf32>
      %71 = arith.mulf %69, %70 : vector<8x16xf32>
      %cst_46 = arith.constant dense<0.000000e+00> : vector<16x16xf32>
      %72 = tpu.matmul %53, %71, %cst_46 {dimension_numbers = #tpu.dot_dimension_numbers<[1], [0], [0], [1], [0, 0, 1, 1], [], []>} : vector<16x8xf32>, vector<8x16xf32>, vector<16x16xf32> -> vector<16x16xf32>
      %73 = vector.broadcast %54 : vector<16x1xf32> to vector<16x16xf32>
      %74 = arith.addf %72, %73 : vector<16x16xf32>
      %75 = arith.index_cast %c0_i32_37 : i32 to index
      %c0_47 = arith.constant 0 : index
      %c0_48 = arith.constant 0 : index
      %76 = vector.load %arg11[%75, %c0_47, %c0_48] : memref<1x16x16xf32, #tpu.memory_space<vmem>>, vector<1x16x16xf32>
      %77 = vector.shape_cast %76 : vector<1x16x16xf32> to vector<16x16xf32>
      %78 = vector.shape_cast %74 : vector<16x16xf32> to vector<1x16x16xf32>
      tpu.vector_store %arg11[%75, %c0_47, %c0_48], %78 {strides = array<i32>} : memref<1x16x16xf32, #tpu.memory_space<vmem>>, vector<1x16x16xf32>,
      %79 = arith.index_cast %c0_i32_37 : i32 to index
      %c0_49 = arith.constant 0 : index
      %c0_50 = arith.constant 0 : index
      %80 = vector.load %arg14[%79, %c0_49, %c0_50] : memref<1x8x1xf32, #tpu.memory_space<vmem>>, vector<1x8x1xf32>
      %81 = vector.shape_cast %80 : vector<1x8x1xf32> to vector<8x1xf32>
      %cst_51 = arith.constant dense<0.000000e+00> : vector<8xf32>
      %82 = vector.multi_reduction <add>, %71, %cst_51 [1] : vector<8x16xf32> to vector<8xf32>
      %83 = vector.shape_cast %82 : vector<8xf32> to vector<8x1xf32>
      %84 = arith.addf %81, %83 : vector<8x1xf32>
      %cst_52 = arith.constant 3.125000e-02 : f32
      %85 = vector.broadcast %cst_52 : f32 to vector<8x1xf32>
      %86 = arith.mulf %84, %85 : vector<8x1xf32>
      %87 = arith.index_cast %c0_i32_37 : i32 to index
      %c0_53 = arith.constant 0 : index
      %c0_54 = arith.constant 0 : index
      %88 = vector.load %arg10[%87, %c0_53, %c0_54] : memref<1x8x1xf32, #tpu.memory_space<vmem>>, vector<1x8x1xf32>
      %89 = vector.shape_cast %88 : vector<1x8x1xf32> to vector<8x1xf32>
      %90 = vector.shape_cast %86 : vector<8x1xf32> to vector<1x8x1xf32>
      tpu.vector_store %arg10[%87, %c0_53, %c0_54], %90 {strides = array<i32>} : memref<1x8x1xf32, #tpu.memory_space<vmem>>, vector<1x8x1xf32>,
      %c1_i32_55 = arith.constant 1 : i32
    } else {
    }
    return
  }
  func.func @transform_0(%arg0: i32, %arg1: i32) -> (i32, i32, i32, i32) {
    %c0_i32 = arith.constant 0 : i32
    %c0_i32_0 = arith.constant 0 : i32
    %c0_i32_1 = arith.constant 0 : i32
    return %arg0, %c0_i32, %c0_i32_0, %arg1 : i32, i32, i32, i32
  }
  func.func @transform_1(%arg0: i32, %arg1: i32) -> (i32, i32) {
    %c0_i32 = arith.constant 0 : i32
    %c0_i32_0 = arith.constant 0 : i32
    %c0_i32_1 = arith.constant 0 : i32
    return %c0_i32, %c0_i32_0 : i32, i32
  }
  func.func @transform_2(%arg0: i32, %arg1: i32) -> (i32, i32) {
    %c0_i32 = arith.constant 0 : i32
    %c0_i32_0 = arith.constant 0 : i32
    %c0_i32_1 = arith.constant 0 : i32
    return %c0_i32, %c0_i32_0 : i32, i32
  }
  func.func @transform_3(%arg0: i32, %arg1: i32) -> (i32, i32) {
    %c0_i32 = arith.constant 0 : i32
    %c0_i32_0 = arith.constant 0 : i32
    %c0_i32_1 = arith.constant 0 : i32
    return %c0_i32, %c0_i32_0 : i32, i32
  }
  func.func @transform_4(%arg0: i32, %arg1: i32) -> (i32, i32) {
    %c0_i32 = arith.constant 0 : i32
    %c0_i32_0 = arith.constant 0 : i32
    %c0_i32_1 = arith.constant 0 : i32
    return %c0_i32, %c0_i32_0 : i32, i32
  }
  func.func @transform_5(%arg0: i32, %arg1: i32) -> (i32, i32) {
    %c0_i32 = arith.constant 0 : i32
    %c0_i32_0 = arith.constant 0 : i32
    %c0_i32_1 = arith.constant 0 : i32
    return %c0_i32, %c0_i32_0 : i32, i32
  }
  func.func @transform_6(%arg0: i32, %arg1: i32) -> (i32, i32) {
    %c0_i32 = arith.constant 0 : i32
    %c0_i32_0 = arith.constant 0 : i32
    %c0_i32_1 = arith.constant 0 : i32
    return %c0_i32, %c0_i32_0 : i32, i32
  }
  func.func @transform_7(%arg0: i32, %arg1: i32) -> (i32, i32) {
    %c0_i32 = arith.constant 0 : i32
    %c0_i32_0 = arith.constant 0 : i32
    %c0_i32_1 = arith.constant 0 : i32
    return %c0_i32, %c0_i32_0 : i32, i32
  }
  func.func @transform_8(%arg0: i32, %arg1: i32) -> (i32, i32, i32) {
    %c0_i32 = arith.constant 0 : i32
    %c0_i32_0 = arith.constant 0 : i32
    %c0_i32_1 = arith.constant 0 : i32
    return %arg0, %c0_i32, %c0_i32_0 : i32, i32, i32
  }
  func.func @transform_9(%arg0: i32, %arg1: i32) -> (i32, i32, i32) {
    %c0_i32 = arith.constant 0 : i32
    %c0_i32_0 = arith.constant 0 : i32
    %c0_i32_1 = arith.constant 0 : i32
    return %arg0, %c0_i32, %c0_i32_0 : i32, i32, i32
  }
  func.func @transform_10(%arg0: i32, %arg1: i32) -> (i32, i32, i32) {
    %c0_i32 = arith.constant 0 : i32
    %c0_i32_0 = arith.constant 0 : i32
    return %arg0, %c0_i32, %arg1 : i32, i32, i32
  }
}

</mosaic_0001>

<llo_original>
// kernel: context_gen_forward.1
$region0: #{context_gen_forward.1}
  #allocation0 [shape = 'u32[]', space=smem, size = 0x4, offset = 0x4, fixed_abs, tag = 'smem constant byte address 0x4 - core index']
  #allocation1 [shape = 'u32[144,128]{1,0:T(1,128)}', space=vmem, size = 0x12000, scoped, tag = 'internal scratch']
  #allocation2 [shape = 'f32[1,4,16]{2,1,0:T(4,128)}', space=vmem, size = 0x800, scoped, tag = 'scratch operand']
  #allocation3 [shape = 'f32[1,8,1]{2,1,0:T(8,128)}', space=vmem, size = 0x1000, scoped, tag = 'scratch operand']
  %s0 = inlined_call_operand.vmem [shape: f32[2,4,16,16], index: 0, kind: input, shape index: {}]
  %s1 = inlined_call_operand.vmem [shape: f32[8,64], index: 1, kind: input, shape index: {}]
  %s2 = inlined_call_operand.vmem [shape: f32[8,4], index: 2, kind: input, shape index: {}]
  %s3 = inlined_call_operand.vmem [shape: f32[8,1], index: 3, kind: input, shape index: {}]
  %s4 = inlined_call_operand.vmem [shape: f32[16,8], index: 4, kind: input, shape index: {}]
  %s5 = inlined_call_operand.vmem [shape: f32[16,1], index: 5, kind: input, shape index: {}]
  %s6 = inlined_call_operand.vmem [shape: f32[16,8], index: 6, kind: input, shape index: {}]
  %s7 = inlined_call_operand.vmem [shape: f32[16,1], index: 7, kind: input, shape index: {}]
  %s8 = inlined_call_operand.vmem [shape: f32[2,8,1], index: 8, kind: output, shape index: {0}]
  %s9 = inlined_call_operand.hbm [shape: f32[2,16,16], index: 9, kind: output, shape index: {1}]
  %s10 = inlined_call_operand.hbm [shape: f32[2,16,16], index: 10, kind: output, shape index: {2}]
  %11 = xla_tuple %s8, %s9, %s10
  %s12 = sld [smem:[#allocation0]]
  $region89: #{context_gen_forward.1} parent=0
    _
  %s14 = ssub.s32 1, %s12
  %s15 = scalar_select 0, %s14, %s12
  $region1: #{context_gen_forward.1} parent=0
    #allocation4 [shape = 'u8[16384]{0}', space=vmem, size = 0x4000, scoped, tag = 'output window, operand 1']
    #allocation5 [shape = 's32[2]{0}', space=sflag, size = 0x8, scoped, tag = 'scoped memory for context_gen_forward.1']
    #allocation6 [shape = 'u8[16384]{0}', space=vmem, size = 0x4000, scoped, tag = 'output window, operand 2']
    #allocation7 [shape = 's32[2]{0}', space=sflag, size = 0x8, scoped, tag = 'scoped memory for context_gen_forward.1']
    %16 = vsyncpa [#allocation5], 0
    %s17 = scalar_lea.sflag [#allocation5], 1
    %18 = vsyncpa %s17, 0
    %19 = vsyncpa [#allocation7], 0
    %s20 = scalar_lea.sflag [#allocation7], 1
    %21 = vsyncpa %s20, 0
    loop: start=0, step=1, limit=4
    $region2: #{context_gen_forward.1} parent=1 // loop_pre_header
      _
    $region3: #{context_gen_forward.1} parent=1 // loop_header
      %s23 = sphi 0, %s27
      %p24 = scmp.ge.s32.totalorder %s23, 4
      %s30 = sphi 0, %s42
      %s31 = sphi 0, %s38
      %s32 = sphi 0, %s30
      %s33 = sphi 0, %s31
      %s34 = sphi 0, %s32
      %s35 = sphi 0, %s33
      %s47 = sphi 0, %s49
      %s50 = sphi 0, %s47
      %s51 = sphi 0, %s50
      %s67 = sphi 0, %s51
      %s71 = sphi 0, %s71
      %s73 = sphi 0, %s71
      %s74 = sphi 0, %s73
      %s88 = sphi 0, %s74
      %s92 = sphi 0, %s92
      %s94 = sphi 0, %s92
      %s95 = sphi 0, %s94
      %s109 = sphi 0, %s95
      %s113 = sphi 0, %s113
      %s115 = sphi 0, %s113
      %s116 = sphi 0, %s115
      %s130 = sphi 0, %s116
      %s134 = sphi 0, %s134
      %s136 = sphi 0, %s134
      %s137 = sphi 0, %s136
      %s151 = sphi 0, %s137
      %s155 = sphi 0, %s155
      %s157 = sphi 0, %s155
      %s158 = sphi 0, %s157
      %s172 = sphi 0, %s158
      %s176 = sphi 0, %s176
      %s178 = sphi 0, %s176
      %s179 = sphi 0, %s178
      %s193 = sphi 0, %s179
      %s197 = sphi 0, %s197
      %s199 = sphi 0, %s197
      %s200 = sphi 0, %s199
      %s214 = sphi 0, %s200
      %s220 = sphi 0, %s222
      %s223 = sphi 0, %s220
      %s224 = sphi 0, %s223
      %s240 = sphi 0, %s224
      %s246 = sphi 0, %s248
      %s249 = sphi 0, %s246
      %s250 = sphi 0, %s249
      %s266 = sphi 0, %s250
      %s274 = sphi 0, %s276
      %s277 = sphi 0, %s274
      %s278 = sphi 0, %s277
      %s294 = sphi 0, %s278
    $region4: #{context_gen_forward.1} parent=1 // loop_header_branch
      %26 = sbr.rel (%p24) target = $region8
    $region5: #{context_gen_forward.1} parent=1 // loop_body
      %s28 = ssub.s32 %s23, 1
      %s29 = ssub.s32 %s23, 2
      %s36 = sadd.s32 1, %s31
      %p37 = scmp.ge.s32.totalorder %s36, 1
      %s38 = scalar_select %p37, 0, %s36
      %s39 = sadd.s32 1, %s30
      %s40 = scalar_select %p37, %s39, %s30
      %p41 = scmp.ge.s32.totalorder %s40, 2
      %s42 = scalar_select %p41, 0, %s40
      %s43 = ssub.s32 %s30, %s42
      %s44 = ssub.s32 %s31, %s38
      %s45 = sor.u32 %s43, %s44
      %p46 = scmp.eq.s32.totalorder %s45, 0
      %s48 = sadd.s32 %s47, 1
      %s49 = scalar_select %p46, %s47, %s48
      %p52 = pneg %p46
      %p53 = scmp.eq.s32.totalorder %s23, 1
      %p54 = por %p52, %p53
      %p55 = scmp.ne.s32.totalorder %s47, %s50
      %p56 = scmp.eq.s32.totalorder %s23, 0
      %p57 = por %p55, %p56
      %p58 = scmp.ne.s32.totalorder %s47, %s50
      %p59 = scmp.eq.s32.totalorder %s28, 1
      %p60 = por %p58, %p59
      %p61 = scmp.ne.s32.totalorder %s50, %s51
      %p62 = scmp.eq.s32.totalorder %s28, 0
      %p63 = por %p61, %p62
      %p64 = scmp.ne.s32.totalorder %s50, %s51
      %p65 = scmp.eq.s32.totalorder %s29, 1
      %p66 = por %p64, %p65
      %p68 = scmp.ne.s32.totalorder %s51, %s67
      %p69 = scmp.eq.s32.totalorder %s29, 0
      %p70 = por %p68, %p69
      %s72 = sadd.s32 %s71, 1
      %p75 = scmp.eq.s32.totalorder %s23, 1
      %p76 = scmp.ne.s32.totalorder %s71, %s73
      %p77 = scmp.eq.s32.totalorder %s23, 0
      %p78 = por %p76, %p77
      %p79 = scmp.ne.s32.totalorder %s71, %s73
      %p80 = scmp.eq.s32.totalorder %s28, 1
      %p81 = por %p79, %p80
      %p82 = scmp.ne.s32.totalorder %s73, %s74
      %p83 = scmp.eq.s32.totalorder %s28, 0
      %p84 = por %p82, %p83
      %p85 = scmp.ne.s32.totalorder %s73, %s74
      %p86 = scmp.eq.s32.totalorder %s29, 1
      %p87 = por %p85, %p86
      %p89 = scmp.ne.s32.totalorder %s74, %s88
      %p90 = scmp.eq.s32.totalorder %s29, 0
      %p91 = por %p89, %p90
      %s93 = sadd.s32 %s92, 1
      %p96 = scmp.eq.s32.totalorder %s23, 1
      %p97 = scmp.ne.s32.totalorder %s92, %s94
      %p98 = scmp.eq.s32.totalorder %s23, 0
      %p99 = por %p97, %p98
      %p100 = scmp.ne.s32.totalorder %s92, %s94
      %p101 = scmp.eq.s32.totalorder %s28, 1
      %p102 = por %p100, %p101
      %p103 = scmp.ne.s32.totalorder %s94, %s95
      %p104 = scmp.eq.s32.totalorder %s28, 0
      %p105 = por %p103, %p104
      %p106 = scmp.ne.s32.totalorder %s94, %s95
      %p107 = scmp.eq.s32.totalorder %s29, 1
      %p108 = por %p106, %p107
      %p110 = scmp.ne.s32.totalorder %s95, %s109
      %p111 = scmp.eq.s32.totalorder %s29, 0
      %p112 = por %p110, %p111
      %s114 = sadd.s32 %s113, 1
      %p117 = scmp.eq.s32.totalorder %s23, 1
      %p118 = scmp.ne.s32.totalorder %s113, %s115
      %p119 = scmp.eq.s32.totalorder %s23, 0
      %p120 = por %p118, %p119
      %p121 = scmp.ne.s32.totalorder %s113, %s115
      %p122 = scmp.eq.s32.totalorder %s28, 1
      %p123 = por %p121, %p122
      %p124 = scmp.ne.s32.totalorder %s115, %s116
      %p125 = scmp.eq.s32.totalorder %s28, 0
      %p126 = por %p124, %p125
      %p127 = scmp.ne.s32.totalorder %s115, %s116
      %p128 = scmp.eq.s32.totalorder %s29, 1
      %p129 = por %p127, %p128
      %p131 = scmp.ne.s32.totalorder %s116, %s130
      %p132 = scmp.eq.s32.totalorder %s29, 0
      %p133 = por %p131, %p132
      %s135 = sadd.s32 %s134, 1
      %p138 = scmp.eq.s32.totalorder %s23, 1
      %p139 = scmp.ne.s32.totalorder %s134, %s136
      %p140 = scmp.eq.s32.totalorder %s23, 0
      %p141 = por %p139, %p140
      %p142 = scmp.ne.s32.totalorder %s134, %s136
      %p143 = scmp.eq.s32.totalorder %s28, 1
      %p144 = por %p142, %p143
      %p145 = scmp.ne.s32.totalorder %s136, %s137
      %p146 = scmp.eq.s32.totalorder %s28, 0
      %p147 = por %p145, %p146
      %p148 = scmp.ne.s32.totalorder %s136, %s137
      %p149 = scmp.eq.s32.totalorder %s29, 1
      %p150 = por %p148, %p149
      %p152 = scmp.ne.s32.totalorder %s137, %s151
      %p153 = scmp.eq.s32.totalorder %s29, 0
      %p154 = por %p152, %p153
      %s156 = sadd.s32 %s155, 1
      %p159 = scmp.eq.s32.totalorder %s23, 1
      %p160 = scmp.ne.s32.totalorder %s155, %s157
      %p161 = scmp.eq.s32.totalorder %s23, 0
      %p162 = por %p160, %p161
      %p163 = scmp.ne.s32.totalorder %s155, %s157
      %p164 = scmp.eq.s32.totalorder %s28, 1
      %p165 = por %p163, %p164
      %p166 = scmp.ne.s32.totalorder %s157, %s158
      %p167 = scmp.eq.s32.totalorder %s28, 0
      %p168 = por %p166, %p167
      %p169 = scmp.ne.s32.totalorder %s157, %s158
      %p170 = scmp.eq.s32.totalorder %s29, 1
      %p171 = por %p169, %p170
      %p173 = scmp.ne.s32.totalorder %s158, %s172
      %p174 = scmp.eq.s32.totalorder %s29, 0
      %p175 = por %p173, %p174
      %s177 = sadd.s32 %s176, 1
      %p180 = scmp.eq.s32.totalorder %s23, 1
      %p181 = scmp.ne.s32.totalorder %s176, %s178
      %p182 = scmp.eq.s32.totalorder %s23, 0
      %p183 = por %p181, %p182
      %p184 = scmp.ne.s32.totalorder %s176, %s178
      %p185 = scmp.eq.s32.totalorder %s28, 1
      %p186 = por %p184, %p185
      %p187 = scmp.ne.s32.totalorder %s178, %s179
      %p188 = scmp.eq.s32.totalorder %s28, 0
      %p189 = por %p187, %p188
      %p190 = scmp.ne.s32.totalorder %s178, %s179
      %p191 = scmp.eq.s32.totalorder %s29, 1
      %p192 = por %p190, %p191
      %p194 = scmp.ne.s32.totalorder %s179, %s193
      %p195 = scmp.eq.s32.totalorder %s29, 0
      %p196 = por %p194, %p195
      %s198 = sadd.s32 %s197, 1
      %p201 = scmp.eq.s32.totalorder %s23, 1
      %p202 = scmp.ne.s32.totalorder %s197, %s199
      %p203 = scmp.eq.s32.totalorder %s23, 0
      %p204 = por %p202, %p203
      %p205 = scmp.ne.s32.totalorder %s197, %s199
      %p206 = scmp.eq.s32.totalorder %s28, 1
      %p207 = por %p205, %p206
      %p208 = scmp.ne.s32.totalorder %s199, %s200
      %p209 = scmp.eq.s32.totalorder %s28, 0
      %p210 = por %p208, %p209
      %p211 = scmp.ne.s32.totalorder %s199, %s200
      %p212 = scmp.eq.s32.totalorder %s29, 1
      %p213 = por %p211, %p212
      %p215 = scmp.ne.s32.totalorder %s200, %s214
      %p216 = scmp.eq.s32.totalorder %s29, 0
      %p217 = por %p215, %p216
      %s218 = ssub.s32 %s30, %s42
      %p219 = scmp.eq.s32.totalorder %s218, 0
      %s221 = sadd.s32 %s220, 1
      %s222 = scalar_select %p219, %s220, %s221
      %p225 = pneg %p219
      %p226 = scmp.eq.s32.totalorder %s23, 1
      %p227 = por %p225, %p226
      %p228 = scmp.ne.s32.totalorder %s220, %s223
      %p229 = scmp.eq.s32.totalorder %s23, 0
      %p230 = por %p228, %p229
      %p231 = scmp.ne.s32.totalorder %s220, %s223
      %p232 = scmp.eq.s32.totalorder %s28, 1
      %p233 = por %p231, %p232
      %p234 = scmp.ne.s32.totalorder %s223, %s224
      %p235 = scmp.eq.s32.totalorder %s28, 0
      %p236 = por %p234, %p235
      %p237 = scmp.ne.s32.totalorder %s223, %s224
      %p238 = scmp.eq.s32.totalorder %s29, 1
      %p239 = por %p237, %p238
      %p241 = scmp.ne.s32.totalorder %s224, %s240
      %p242 = scmp.eq.s32.totalorder %s29, 0
      %p243 = por %p241, %p242
      %s244 = ssub.s32 %s30, %s42
      %p245 = scmp.eq.s32.totalorder %s244, 0
      %s247 = sadd.s32 %s246, 1
      %s248 = scalar_select %p245, %s246, %s247
      %p251 = pneg %p245
      %p252 = scmp.eq.s32.totalorder %s23, 1
      %p253 = por %p251, %p252
      %p254 = scmp.ne.s32.totalorder %s246, %s249
      %p255 = scmp.eq.s32.totalorder %s23, 0
      %p256 = por %p254, %p255
      %p257 = scmp.ne.s32.totalorder %s246, %s249
      %p258 = scmp.eq.s32.totalorder %s28, 1
      %p259 = por %p257, %p258
      %p260 = scmp.ne.s32.totalorder %s249, %s250
      %p261 = scmp.eq.s32.totalorder %s28, 0
      %p262 = por %p260, %p261
      %p263 = scmp.ne.s32.totalorder %s249, %s250
      %p264 = scmp.eq.s32.totalorder %s29, 1
      %p265 = por %p263, %p264
      %p267 = scmp.ne.s32.totalorder %s250, %s266
      %p268 = scmp.eq.s32.totalorder %s29, 0
      %p269 = por %p267, %p268
      %s270 = ssub.s32 %s30, %s42
      %s271 = ssub.s32 %s31, %s38
      %s272 = sor.u32 %s270, %s271
      %p273 = scmp.eq.s32.totalorder %s272, 0
      %s275 = sadd.s32 %s274, 1
      %s276 = scalar_select %p273, %s274, %s275
      %p279 = pneg %p273
      %p280 = scmp.eq.s32.totalorder %s23, 1
      %p281 = por %p279, %p280
      %p282 = scmp.ne.s32.totalorder %s274, %s277
      %p283 = scmp.eq.s32.totalorder %s23, 0
      %p284 = por %p282, %p283
      %p285 = scmp.ne.s32.totalorder %s274, %s277
      %p286 = scmp.eq.s32.totalorder %s28, 1
      %p287 = por %p285, %p286
      %p288 = scmp.ne.s32.totalorder %s277, %s278
      %p289 = scmp.eq.s32.totalorder %s28, 0
      %p290 = por %p288, %p289
      %p291 = scmp.ne.s32.totalorder %s277, %s278
      %p292 = scmp.eq.s32.totalorder %s29, 1
      %p293 = por %p291, %p292
      %p295 = scmp.ne.s32.totalorder %s278, %s294
      %p296 = scmp.eq.s32.totalorder %s29, 0
      %p297 = por %p295, %p296
      %p298 = scmp.le.s32.totalorder 1, %s23
      %p299 = scmp.lt.s32.totalorder %s23, 3
      %p300 = pnand %p298, %p299
      %p301 = pneg %p300
      // Predicated region
      $region9: #{context_gen_forward.1} parent=5 // pred_check
        _
      $region10: #{context_gen_forward.1} parent=5 // pred_check_branch
        %303 = sbr.rel (%p300) target = $region12
      $region11: #{context_gen_forward.1} parent=5 // pred_region
        %s304 = ssub.s32 %s23, 1
        // Predicated region
        $region13: #{context_gen_forward.1} parent=11 // pred_check
          %p305 = pneg %p84
        $region14: #{context_gen_forward.1} parent=11 // pred_check_branch
          %307 = sbr.rel (%p305) target = $region16
        $region15: #{context_gen_forward.1} parent=11 // pred_region
          _
        $region16: #{context_gen_forward.1} parent=11 // pred_fallthru
          _
        // Predicated region
        $region17: #{context_gen_forward.1} parent=11 // pred_check
          %p308 = pneg %p105
        $region18: #{context_gen_forward.1} parent=11 // pred_check_branch
          %310 = sbr.rel (%p308) target = $region20
        $region19: #{context_gen_forward.1} parent=11 // pred_region
          _
        $region20: #{context_gen_forward.1} parent=11 // pred_fallthru
          _
        // Predicated region
        $region21: #{context_gen_forward.1} parent=11 // pred_check
          %p311 = pneg %p126
        $region22: #{context_gen_forward.1} parent=11 // pred_check_branch
          %313 = sbr.rel (%p311) target = $region24
        $region23: #{context_gen_forward.1} parent=11 // pred_region
          _
        $region24: #{context_gen_forward.1} parent=11 // pred_fallthru
          _
        // Predicated region
        $region25: #{context_gen_forward.1} parent=11 // pred_check
          %p314 = pneg %p147
        $region26: #{context_gen_forward.1} parent=11 // pred_check_branch
          %316 = sbr.rel (%p314) target = $region28
        $region27: #{context_gen_forward.1} parent=11 // pred_region
          _
        $region28: #{context_gen_forward.1} parent=11 // pred_fallthru
          _
        // Predicated region
        $region29: #{context_gen_forward.1} parent=11 // pred_check
          %p317 = pneg %p168
        $region30: #{context_gen_forward.1} parent=11 // pred_check_branch
          %319 = sbr.rel (%p317) target = $region32
        $region31: #{context_gen_forward.1} parent=11 // pred_region
          _
        $region32: #{context_gen_forward.1} parent=11 // pred_fallthru
          _
        // Predicated region
        $region33: #{context_gen_forward.1} parent=11 // pred_check
          %p320 = pneg %p189
        $region34: #{context_gen_forward.1} parent=11 // pred_check_branch
          %322 = sbr.rel (%p320) target = $region36
        $region35: #{context_gen_forward.1} parent=11 // pred_region
          _
        $region36: #{context_gen_forward.1} parent=11 // pred_fallthru
          _
        // Predicated region
        $region37: #{context_gen_forward.1} parent=11 // pred_check
          %p323 = pneg %p210
        $region38: #{context_gen_forward.1} parent=11 // pred_check_branch
          %325 = sbr.rel (%p323) target = $region40
        $region39: #{context_gen_forward.1} parent=11 // pred_region
          _
        $region40: #{context_gen_forward.1} parent=11 // pred_fallthru
          _
      $region12: #{context_gen_forward.1} parent=5 // pred_fallthru
        _
      %p326 = scmp.lt.s32.totalorder %s23, 2
      // Predicated region
      $region41: #{context_gen_forward.1} parent=5 // pred_check
        %p327 = pneg %p326
      $region42: #{context_gen_forward.1} parent=5 // pred_check_branch
        %329 = sbr.rel (%p327) target = $region44
      $region43: #{context_gen_forward.1} parent=5 // pred_region
        // Predicated region
        $region45: #{context_gen_forward.1} parent=43 // pred_check
          %p330 = pneg %p57
        $region46: #{context_gen_forward.1} parent=43 // pred_check_branch
          %332 = sbr.rel (%p330) target = $region48
        $region47: #{context_gen_forward.1} parent=43 // pred_region
          %p333 = scmp.lt.s32.totalorder %s30, 1
          %s334 = scalar_select %p333, %s30, 1
          %p335 = scmp.lt.s32.totalorder %s31, 0
          %s336 = scalar_select %p335, %s31, 0
          %s337 = smul.addr %s334, 8
          %s338 = sadd.s32 %s336, %s337
          %s339 = smul.addr %s338, 8
          %s340 = scalar_lea.vmem %s0, %s339
        $region48: #{context_gen_forward.1} parent=43 // pred_fallthru
          _
      $region44: #{context_gen_forward.1} parent=5 // pred_fallthru
        _
      %p341 = scmp.le.s32.totalorder 1, %s23
      %p342 = scmp.lt.s32.totalorder %s23, 3
      %p343 = pnand %p341, %p342
      %p344 = pneg %p343
      // Predicated region
      $region49: #{context_gen_forward.1} parent=5 // pred_check
        _
      $region50: #{context_gen_forward.1} parent=5 // pred_check_branch
        %346 = sbr.rel (%p343) target = $region52
      $region51: #{context_gen_forward.1} parent=5 // pred_region
        %s347 = ssub.s32 %s23, 1
        %p348 = scmp.lt.s32.totalorder %s32, 1
        %s349 = scalar_select %p348, %s32, 1
        %p350 = scmp.lt.s32.totalorder %s33, 0
        %s351 = scalar_select %p350, %s33, 0
        %s352 = smul.addr %s349, 8
        %s353 = sadd.s32 %s351, %s352
        %s354 = smul.addr %s353, 8
        %s355 = scalar_lea.vmem %s0, %s354
        %p356 = pneg %p63
        %p357 = pneg %p60
        %p358 = pneg %p84
        %p359 = pneg %p81
        %p360 = pneg %p105
        %p361 = pneg %p102
        %p362 = pneg %p126
        %p363 = pneg %p123
        %p364 = pneg %p147
        %p365 = pneg %p144
        %p366 = pneg %p168
        %p367 = pneg %p165
        %p368 = pneg %p189
        %p369 = pneg %p186
        %p370 = pneg %p210
        %p371 = pneg %p207
        %p372 = pneg %p236
        %p373 = pneg %p233
        %p374 = scmp.lt.s32.totalorder %s32, 1
        %s375 = scalar_select %p374, %s32, 1
        %s376 = smul.addr %s375, 8
        %s377 = scalar_lea.vmem %s8, %s376
        %p378 = pneg %p262
        %p379 = pneg %p259
        %s380 = sand.u32 %s249, 1
        %s381 = scalar_lea.sflag [#allocation5], %s380
        %s382 = sand.u32 %s249, 1
        %s383 = smul.addr %s382, 16
        %s384 = scalar_lea.vmem [#allocation4], %s383
        %p385 = pneg %p290
        %p386 = pneg %p287
        %s387 = sand.u32 %s277, 1
        %s388 = scalar_lea.sflag [#allocation7], %s387
        %s389 = sand.u32 %s277, 1
        %s390 = smul.addr %s389, 16
        %s391 = scalar_lea.vmem [#allocation6], %s390
        %p392 = scmp.lt.s32.totalorder %s32, 1
        %s393 = scalar_select %p392, %s32, 1
        %p394 = scmp.lt.s32.totalorder %s33, 0
        %s395 = scalar_select %p394, %s33, 0
        %s396 = smul.addr %s393, 8
        %s397 = sadd.s32 %s395, %s396
        %s398 = smul.addr %s397, 8
        %s399 = scalar_lea.vmem %s0, %s398
        %p400 = scmp.lt.s32.totalorder %s32, 1
        %s401 = scalar_select %p400, %s32, 1
        %s402 = smul.addr %s401, 8
        %s403 = scalar_lea.vmem %s8, %s402
        %p404 = scmp.eq.s32.totalorder %s33, 0
        // Predicated region
        $region53: #{context_gen_forward.1} parent=51 // pred_check
          %p405 = pneg %p404
        $region54: #{context_gen_forward.1} parent=51 // pred_check_branch
          %407 = sbr.rel (%p405) target = $region56
        $region55: #{context_gen_forward.1} parent=51 // pred_region
          %vm408 = vcmask 125952
          %409 = vst.msk [vmem:[#allocation2] sm:$0xf] %vm408, 0.0
          %vm410 = vcmask 7168
          %411 = vst.msk [vmem:[#allocation3] sm:$0xff] %vm410, 0.0
        $region56: #{context_gen_forward.1} parent=51 // pred_fallthru
          _
        %v412 = vld [vmem:[%s1] sm:$0xff]
        %v413 = vld [vmem:[%s3] sm:$0xff]
        %v414 = vld [vmem:[%s6] sm:$0xff]
        %v415 = vld [vmem:[%s6 + $0x8] sm:$0xff]
        %v416 = vld [vmem:[%s7] sm:$0xff]
        %v417 = vld [vmem:[%s7 + $0x8] sm:$0xff]
        %v418 = vld [vmem:[%s399] sm:$0xff]
        %v419 = vld [vmem:[%s399 + $0x8] sm:$0xff]
        %v420 = vld [vmem:[%s399 + $0x10] sm:$0xff]
        %v421 = vld [vmem:[%s399 + $0x18] sm:$0xff]
        %v422 = vld [vmem:[%s399 + $0x20] sm:$0xff]
        %v423 = vld [vmem:[%s399 + $0x28] sm:$0xff]
        %v424 = vld [vmem:[%s399 + $0x30] sm:$0xff]
        %v425 = vld [vmem:[%s399 + $0x38] sm:$0xff]
        %v426 = vld [vmem:[#allocation2] sm:$0xf]
        %vm427 = vcmask 130048
        %v428 = vsel %vm427, %v418, 0.0
        %429 = vadd.xlane.f32.xlu0 %v428
        %v430 = vpop.xlane.xlu0 %429
        %v431 = vsel %vm427, %v419, 0.0
        %432 = vadd.xlane.f32.xlu0 %v431
        %v433 = vpop.xlane.xlu0 %432
        %v434 = vsel %vm427, %v420, 0.0
        %435 = vadd.xlane.f32.xlu0 %v434
        %v436 = vpop.xlane.xlu0 %435
        %v437 = vsel %vm427, %v421, 0.0
        %438 = vadd.xlane.f32.xlu0 %v437
        %v439 = vpop.xlane.xlu0 %438
        %v440 = vsel %vm427, %v422, 0.0
        %441 = vadd.xlane.f32.xlu0 %v440
        %v442 = vpop.xlane.xlu0 %441
        %v443 = vsel %vm427, %v423, 0.0
        %444 = vadd.xlane.f32.xlu0 %v443
        %v445 = vpop.xlane.xlu0 %444
        %v446 = vsel %vm427, %v424, 0.0
        %447 = vadd.xlane.f32.xlu0 %v446
        %v448 = vpop.xlane.xlu0 %447
        %v449 = vsel %vm427, %v425, 0.0
        %450 = vadd.xlane.f32.xlu0 %v449
        %v451 = vpop.xlane.xlu0 %450
        %v460 = vlaneseq
        %v461 = vand.u32 %v460, 127
        %v462 = vlaneseq
        %v463 = vshrl.u32 %v462, 7
        %v464 = vsub.s32 %v461, %v463
        %v465 = vrot.slane %v430, %v464
        %v466 = vadd.s32 %v461, 4294967288
        %v467 = vlaneseq
        %v468 = vshrl.u32 %v467, 7
        %v469 = vsub.s32 %v466, %v468
        %v470 = vrot.slane %v433, %v469
        %vm471 = vcmask 130112
        %v472 = vsel %vm471, %v470, %v465
        %v473 = vlaneseq
        %v474 = vshrl.u32 %v473, 7
        %v475 = vsub.s32 %v461, %v474
        %v476 = vrot.slane %v436, %v475
        %v477 = vlaneseq
        %v478 = vshrl.u32 %v477, 7
        %v479 = vsub.s32 %v466, %v478
        %v480 = vrot.slane %v439, %v479
        %v481 = vsel %vm471, %v480, %v476
        %v482 = vlaneseq
        %v483 = vshrl.u32 %v482, 7
        %v484 = vsub.s32 %v461, %v483
        %v485 = vrot.slane %v442, %v484
        %v486 = vlaneseq
        %v487 = vshrl.u32 %v486, 7
        %v488 = vsub.s32 %v466, %v487
        %v489 = vrot.slane %v445, %v488
        %v490 = vsel %vm471, %v489, %v485
        %v491 = vlaneseq
        %v492 = vshrl.u32 %v491, 7
        %v493 = vsub.s32 %v461, %v492
        %v494 = vrot.slane %v448, %v493
        %v495 = vlaneseq
        %v496 = vshrl.u32 %v495, 7
        %v497 = vsub.s32 %v466, %v496
        %v498 = vrot.slane %v451, %v497
        %v499 = vsel %vm471, %v498, %v494
        %vm500 = vcmask 1041409
        %v501 = vsel %vm500, %v481, %v472
        %vm502 = vcmask 1042434
        %v503 = vsel %vm502, %v490, %v501
        %vm504 = vcmask 1043459
        %v505 = vsel %vm504, %v499, %v503
        %v507 = vadd.f32 %v426, %v505
        %vm508 = vcmask 125952
        %509 = vst.msk [vmem:[#allocation2] sm:$0xf] %vm508, %v507
        %511 = vset.pattern.permute.xlu0 0
        %512 = vperm.xlu0 %511, %v413
        %v513 = vpop.permute.xlu0 %512
        %vm515 = vcmask 523264
        %v517 = vsel %vm515, %v412, 0
        %519 = vmatprep.subr.mxu0 0.0
        %520 = vmatpush1.msra.mxu0 0.0
        %521 = vmatprep.subr.mxu0 0.0
        %522 = vmatpush1.msra.mxu0 0.0
        %523 = vmatprep.subr.mxu0 0.0
        %524 = vmatpush1.msra.mxu0 0.0
        %525 = vmatprep.subr.mxu0 0.0
        %526 = vmatpush1.msra.mxu0 0.0
        %527 = vmatprep.subr.mxu0 0.0
        %528 = vmatpush1.msra.mxu0 0.0
        %529 = vmatprep.subr.mxu0 0.0
        %530 = vmatpush1.msra.mxu0 0.0
        %531 = vmatprep.subr.mxu0 0.0
        %532 = vmatpush1.msra.mxu0 0.0
        %533 = vmatprep.subr.mxu0 0.0
        %534 = vmatpush1.msra.mxu0 0.0
        %535 = vmatprep.subr.mxu0 0.0
        %536 = vmatpush1.msra.mxu0 %v425
        %537 = vmatprep.subr.mxu0 0.0
        %538 = vmatpush1.msra.mxu0 %v424
        %539 = vmatprep.subr.mxu0 0.0
        %540 = vmatpush1.msra.mxu0 %v423
        %541 = vmatprep.subr.mxu0 0.0
        %542 = vmatpush1.msra.mxu0 %v422
        %543 = vmatprep.subr.mxu0 0.0
        %544 = vmatpush1.msra.mxu0 %v421
        %545 = vmatprep.subr.mxu0 0.0
        %546 = vmatpush1.msra.mxu0 %v420
        %547 = vmatprep.subr.mxu0 0.0
        %548 = vmatpush1.msra.mxu0 %v419
        %549 = vmatprep.subr.mxu0 0.0
        %550 = vmatpush1.msra.mxu0 %v418
        %551 = vmatprep.subr.mxu0 0.0
        %552 = vmatpush2.msra.mxu0 0.0
        %553 = vmatprep.subr.mxu0 0.0
        %554 = vmatpush2.msra.mxu0 0.0
        %555 = vmatprep.subr.mxu0 0.0
        %556 = vmatpush2.msra.mxu0 0.0
        %557 = vmatprep.subr.mxu0 0.0
        %558 = vmatpush2.msra.mxu0 0.0
        %559 = vmatprep.subr.mxu0 0.0
        %560 = vmatpush2.msra.mxu0 0.0
        %561 = vmatprep.subr.mxu0 0.0
        %562 = vmatpush2.msra.mxu0 0.0
        %563 = vmatprep.subr.mxu0 0.0
        %564 = vmatpush2.msra.mxu0 0.0
        %565 = vmatprep.subr.mxu0 0.0
        %566 = vmatpush2.msra.mxu0 0.0
        %567 = vmatprep.subr.mxu0 0.0
        %568 = vmatpush2.msra.mxu0 0.0
        %569 = vmatprep.subr.mxu0 0.0
        %570 = vmatpush2.msra.mxu0 0.0
        %571 = vmatprep.subr.mxu0 0.0
        %572 = vmatpush2.msra.mxu0 0.0
        %573 = vmatprep.subr.mxu0 0.0
        %574 = vmatpush2.msra.mxu0 0.0
        %575 = vmatprep.subr.mxu0 0.0
        %576 = vmatpush2.msra.mxu0 0.0
        %577 = vmatprep.subr.mxu0 0.0
        %578 = vmatpush2.msra.mxu0 0.0
        %579 = vmatprep.subr.mxu0 0.0
        %580 = vmatpush2.msra.mxu0 0.0
        %581 = vmatprep.subr.mxu0 0.0
        %582 = vmatpush2.msra.mxu0 0.0
        %583 = vmatprep.mubr.f32.mxu0 0.0
        %584 = vmatmul.mubr.f32.gmra.mxu0 %v517
        %v585 = vpop.f32.mrf.mxu0
        %v586 = vadd.f32 %v513, %v585
        %v587 = vpop.f32.mrf.mxu0
        %588 = vdwg.mxu0
        %v589 = vadd.f32 %v586, 3.0
        %v590 = vmax.f32 %v589, 0.0
        %v591 = vmin.f32 %v590, 6.0
        %v592 = vmul.f32 %v586, %v591
        %v593 = vmul.f32 %v592, 0.16666667
        %v594 = vld [vmem:[#allocation3] sm:$0xff]
        %v595 = vsel %vm427, %v593, 0.0
        %596 = vadd.xlane.f32.xlu0 %v595
        %v597 = vpop.xlane.xlu0 %596
        %v598 = vadd.f32 %v594, %v597
        %vm599 = vcmask 7168
        %600 = vst.msk [vmem:[#allocation3] sm:$0xff] %vm599, %v598
        %602 = vset.pattern.permute.xlu0 0
        %603 = vperm.xlu0 %602, %v416
        %v604 = vpop.permute.xlu0 %603
        %607 = vset.pattern.permute.xlu0 0
        %608 = vperm.xlu0 %607, %v417
        %v609 = vpop.permute.xlu0 %608
        %vm611 = vcmask 64512
        %v613 = vsel %vm611, %v414, 0
        %v616 = vsel %vm611, %v415, 0
        %618 = vmatprep.subr.mxu0 0.0
        %619 = vmatpush1.msra.mxu0 0.0
        %620 = vmatprep.subr.mxu0 0.0
        %621 = vmatpush1.msra.mxu0 0.0
        %622 = vmatprep.subr.mxu0 0.0
        %623 = vmatpush1.msra.mxu0 0.0
        %624 = vmatprep.subr.mxu0 0.0
        %625 = vmatpush1.msra.mxu0 0.0
        %626 = vmatprep.subr.mxu0 0.0
        %627 = vmatpush1.msra.mxu0 0.0
        %628 = vmatprep.subr.mxu0 0.0
        %629 = vmatpush1.msra.mxu0 0.0
        %630 = vmatprep.subr.mxu0 0.0
        %631 = vmatpush1.msra.mxu0 0.0
        %632 = vmatprep.subr.mxu0 0.0
        %633 = vmatpush1.msra.mxu0 0.0
        %634 = vmatprep.subr.mxu0 0.0
        %635 = vmatpush1.msra.mxu0 0.0
        %636 = vmatprep.subr.mxu0 0.0
        %637 = vmatpush1.msra.mxu0 0.0
        %638 = vmatprep.subr.mxu0 0.0
        %639 = vmatpush1.msra.mxu0 0.0
        %640 = vmatprep.subr.mxu0 0.0
        %641 = vmatpush1.msra.mxu0 0.0
        %642 = vmatprep.subr.mxu0 0.0
        %643 = vmatpush1.msra.mxu0 0.0
        %644 = vmatprep.subr.mxu0 0.0
        %645 = vmatpush1.msra.mxu0 0.0
        %646 = vmatprep.subr.mxu0 0.0
        %647 = vmatpush1.msra.mxu0 0.0
        %648 = vmatprep.subr.mxu0 0.0
        %649 = vmatpush1.msra.mxu0 %v593
        %650 = vmatprep.subr.mxu0 0.0
        %651 = vmatpush2.msra.mxu0 0.0
        %652 = vmatprep.subr.mxu0 0.0
        %653 = vmatpush2.msra.mxu0 0.0
        %654 = vmatprep.subr.mxu0 0.0
        %655 = vmatpush2.msra.mxu0 0.0
        %656 = vmatprep.subr.mxu0 0.0
        %657 = vmatpush2.msra.mxu0 0.0
        %658 = vmatprep.subr.mxu0 0.0
        %659 = vmatpush2.msra.mxu0 0.0
        %660 = vmatprep.subr.mxu0 0.0
        %661 = vmatpush2.msra.mxu0 0.0
        %662 = vmatprep.subr.mxu0 0.0
        %663 = vmatpush2.msra.mxu0 0.0
        %664 = vmatprep.subr.mxu0 0.0
        %665 = vmatpush2.msra.mxu0 0.0
        %666 = vmatprep.subr.mxu0 0.0
        %667 = vmatpush2.msra.mxu0 0.0
        %668 = vmatprep.subr.mxu0 0.0
        %669 = vmatpush2.msra.mxu0 0.0
        %670 = vmatprep.subr.mxu0 0.0
        %671 = vmatpush2.msra.mxu0 0.0
        %672 = vmatprep.subr.mxu0 0.0
        %673 = vmatpush2.msra.mxu0 0.0
        %674 = vmatprep.subr.mxu0 0.0
        %675 = vmatpush2.msra.mxu0 0.0
        %676 = vmatprep.subr.mxu0 0.0
        %677 = vmatpush2.msra.mxu0 0.0
        %678 = vmatprep.subr.mxu0 0.0
        %679 = vmatpush2.msra.mxu0 0.0
        %680 = vmatprep.subr.mxu0 0.0
        %681 = vmatpush2.msra.mxu0 0.0
        %682 = vmatprep.mubr.f32.mxu0 0.0
        %683 = vmatmul.mubr.f32.gmra.mxu0 %v613
        %v684 = vpop.f32.mrf.mxu0
        %v685 = vadd.f32 %v604, %v684
        %v686 = vpop.f32.mrf.mxu0
        %687 = vmatprep.mubr.f32.mxu0 0.0
        %688 = vmatmul.mubr.f32.gmra.mxu0 %v616
        %v689 = vpop.f32.mrf.mxu0
        %v690 = vadd.f32 %v609, %v689
        %v691 = vpop.f32.mrf.mxu0
        %692 = vdwg.mxu0
        %693 = vst.msk [vmem:[%s391] sm:$0xff] %vm427, %v685
        %694 = vst.msk [vmem:[%s391 + $0x8] sm:$0xff] %vm427, %v690
        // Predicated region
        $region57: #{context_gen_forward.1} parent=51 // pred_check
          %p695 = pneg %p404
        $region58: #{context_gen_forward.1} parent=51 // pred_check_branch
          %697 = sbr.rel (%p695) target = $region60
        $region59: #{context_gen_forward.1} parent=51 // pred_region
          %v698 = vld [vmem:[%s2] sm:$0xff]
          %v699 = vld [vmem:[%s4] sm:$0xff]
          %v700 = vld [vmem:[%s4 + $0x8] sm:$0xff]
          %v701 = vld [vmem:[%s5] sm:$0xff]
          %v702 = vld [vmem:[%s5 + $0x8] sm:$0xff]
          %v703 = vld [vmem:[#allocation2] sm:$0xf]
          %v704 = vmul.f32 %v703, 0.0625
          %vm705 = vcmask 31744
          %v707 = vsel %vm705, %v698, 0
          %vm709 = vcmask 1043456
          %v711 = vsel %vm709, %v704, 0
          %713 = vmatprep.subr.mxu0 0.0
          %714 = vmatpush1.msra.mxu0 0.0
          %715 = vmatprep.subr.mxu0 0.0
          %716 = vmatpush1.msra.mxu0 0.0
          %717 = vmatprep.subr.mxu0 0.0
          %718 = vmatpush1.msra.mxu0 0.0
          %719 = vmatprep.subr.mxu0 0.0
          %720 = vmatpush1.msra.mxu0 0.0
          %721 = vmatprep.subr.mxu0 0.0
          %722 = vmatpush1.msra.mxu0 0.0
          %723 = vmatprep.subr.mxu0 0.0
          %724 = vmatpush1.msra.mxu0 0.0
          %725 = vmatprep.subr.mxu0 0.0
          %726 = vmatpush1.msra.mxu0 0.0
          %727 = vmatprep.subr.mxu0 0.0
          %728 = vmatpush1.msra.mxu0 0.0
          %729 = vmatprep.subr.mxu0 0.0
          %730 = vmatpush1.msra.mxu0 0.0
          %731 = vmatprep.subr.mxu0 0.0
          %732 = vmatpush1.msra.mxu0 0.0
          %733 = vmatprep.subr.mxu0 0.0
          %734 = vmatpush1.msra.mxu0 0.0
          %735 = vmatprep.subr.mxu0 0.0
          %736 = vmatpush1.msra.mxu0 0.0
          %737 = vmatprep.subr.mxu0 0.0
          %738 = vmatpush1.msra.mxu0 0.0
          %739 = vmatprep.subr.mxu0 0.0
          %740 = vmatpush1.msra.mxu0 0.0
          %741 = vmatprep.subr.mxu0 0.0
          %742 = vmatpush1.msra.mxu0 0.0
          %743 = vmatprep.subr.mxu0 0.0
          %744 = vmatpush1.msra.mxu0 %v711
          %745 = vmatprep.subr.mxu0 0.0
          %746 = vmatpush2.msra.mxu0 0.0
          %747 = vmatprep.subr.mxu0 0.0
          %748 = vmatpush2.msra.mxu0 0.0
          %749 = vmatprep.subr.mxu0 0.0
          %750 = vmatpush2.msra.mxu0 0.0
          %751 = vmatprep.subr.mxu0 0.0
          %752 = vmatpush2.msra.mxu0 0.0
          %753 = vmatprep.subr.mxu0 0.0
          %754 = vmatpush2.msra.mxu0 0.0
          %755 = vmatprep.subr.mxu0 0.0
          %756 = vmatpush2.msra.mxu0 0.0
          %757 = vmatprep.subr.mxu0 0.0
          %758 = vmatpush2.msra.mxu0 0.0
          %759 = vmatprep.subr.mxu0 0.0
          %760 = vmatpush2.msra.mxu0 0.0
          %761 = vmatprep.subr.mxu0 0.0
          %762 = vmatpush2.msra.mxu0 0.0
          %763 = vmatprep.subr.mxu0 0.0
          %764 = vmatpush2.msra.mxu0 0.0
          %765 = vmatprep.subr.mxu0 0.0
          %766 = vmatpush2.msra.mxu0 0.0
          %767 = vmatprep.subr.mxu0 0.0
          %768 = vmatpush2.msra.mxu0 0.0
          %769 = vmatprep.subr.mxu0 0.0
          %770 = vmatpush2.msra.mxu0 0.0
          %771 = vmatprep.subr.mxu0 0.0
          %772 = vmatpush2.msra.mxu0 0.0
          %773 = vmatprep.subr.mxu0 0.0
          %774 = vmatpush2.msra.mxu0 0.0
          %775 = vmatprep.subr.mxu0 0.0
          %776 = vmatpush2.msra.mxu0 0.0
          %777 = vmatprep.mubr.f32.mxu0 0.0
          %778 = vmatmul.mubr.f32.gmra.mxu0 %v707
          %v779 = vpop.f32.mrf.mxu0
          %v780 = vadd.f32 %v513, %v779
          %v781 = vpop.f32.mrf.mxu0
          %782 = vdwg.mxu0
          %v783 = vadd.f32 %v780, 3.0
          %v784 = vmax.f32 %v783, 0.0
          %v785 = vmin.f32 %v784, 6.0
          %v786 = vmul.f32 %v780, %v785
          %v787 = vmul.f32 %v786, 0.16666667
          %789 = vset.pattern.permute.xlu0 0
          %790 = vperm.xlu0 %789, %v701
          %v791 = vpop.permute.xlu0 %790
          %794 = vset.pattern.permute.xlu0 0
          %795 = vperm.xlu0 %794, %v702
          %v796 = vpop.permute.xlu0 %795
          %v799 = vsel %vm611, %v699, 0
          %v802 = vsel %vm611, %v700, 0
          %804 = vmatprep.subr.mxu0 0.0
          %805 = vmatpush1.msra.mxu0 0.0
          %806 = vmatprep.subr.mxu0 0.0
          %807 = vmatpush1.msra.mxu0 0.0
          %808 = vmatprep.subr.mxu0 0.0
          %809 = vmatpush1.msra.mxu0 0.0
          %810 = vmatprep.subr.mxu0 0.0
          %811 = vmatpush1.msra.mxu0 0.0
          %812 = vmatprep.subr.mxu0 0.0
          %813 = vmatpush1.msra.mxu0 0.0
          %814 = vmatprep.subr.mxu0 0.0
          %815 = vmatpush1.msra.mxu0 0.0
          %816 = vmatprep.subr.mxu0 0.0
          %817 = vmatpush1.msra.mxu0 0.0
          %818 = vmatprep.subr.mxu0 0.0
          %819 = vmatpush1.msra.mxu0 0.0
          %820 = vmatprep.subr.mxu0 0.0
          %821 = vmatpush1.msra.mxu0 0.0
          %822 = vmatprep.subr.mxu0 0.0
          %823 = vmatpush1.msra.mxu0 0.0
          %824 = vmatprep.subr.mxu0 0.0
          %825 = vmatpush1.msra.mxu0 0.0
          %826 = vmatprep.subr.mxu0 0.0
          %827 = vmatpush1.msra.mxu0 0.0
          %828 = vmatprep.subr.mxu0 0.0
          %829 = vmatpush1.msra.mxu0 0.0
          %830 = vmatprep.subr.mxu0 0.0
          %831 = vmatpush1.msra.mxu0 0.0
          %832 = vmatprep.subr.mxu0 0.0
          %833 = vmatpush1.msra.mxu0 0.0
          %834 = vmatprep.subr.mxu0 0.0
          %835 = vmatpush1.msra.mxu0 %v787
          %836 = vmatprep.subr.mxu0 0.0
          %837 = vmatpush2.msra.mxu0 0.0
          %838 = vmatprep.subr.mxu0 0.0
          %839 = vmatpush2.msra.mxu0 0.0
          %840 = vmatprep.subr.mxu0 0.0
          %841 = vmatpush2.msra.mxu0 0.0
          %842 = vmatprep.subr.mxu0 0.0
          %843 = vmatpush2.msra.mxu0 0.0
          %844 = vmatprep.subr.mxu0 0.0
          %845 = vmatpush2.msra.mxu0 0.0
          %846 = vmatprep.subr.mxu0 0.0
          %847 = vmatpush2.msra.mxu0 0.0
          %848 = vmatprep.subr.mxu0 0.0
          %849 = vmatpush2.msra.mxu0 0.0
          %850 = vmatprep.subr.mxu0 0.0
          %851 = vmatpush2.msra.mxu0 0.0
          %852 = vmatprep.subr.mxu0 0.0
          %853 = vmatpush2.msra.mxu0 0.0
          %854 = vmatprep.subr.mxu0 0.0
          %855 = vmatpush2.msra.mxu0 0.0
          %856 = vmatprep.subr.mxu0 0.0
          %857 = vmatpush2.msra.mxu0 0.0
          %858 = vmatprep.subr.mxu0 0.0
          %859 = vmatpush2.msra.mxu0 0.0
          %860 = vmatprep.subr.mxu0 0.0
          %861 = vmatpush2.msra.mxu0 0.0
          %862 = vmatprep.subr.mxu0 0.0
          %863 = vmatpush2.msra.mxu0 0.0
          %864 = vmatprep.subr.mxu0 0.0
          %865 = vmatpush2.msra.mxu0 0.0
          %866 = vmatprep.subr.mxu0 0.0
          %867 = vmatpush2.msra.mxu0 0.0
          %868 = vmatprep.mubr.f32.mxu0 0.0
          %869 = vmatmul.mubr.f32.gmra.mxu0 %v799
          %v870 = vpop.f32.mrf.mxu0
          %v871 = vadd.f32 %v791, %v870
          %v872 = vpop.f32.mrf.mxu0
          %873 = vmatprep.mubr.f32.mxu0 0.0
          %874 = vmatmul.mubr.f32.gmra.mxu0 %v802
          %v875 = vpop.f32.mrf.mxu0
          %v876 = vadd.f32 %v796, %v875
          %v877 = vpop.f32.mrf.mxu0
          %878 = vdwg.mxu0
          %879 = vst.msk [vmem:[%s384] sm:$0xff] %vm427, %v871
          %880 = vst.msk [vmem:[%s384 + $0x8] sm:$0xff] %vm427, %v876
          %v881 = vld [vmem:[#allocation3] sm:$0xff]
          %v882 = vsel %vm427, %v787, 0.0
          %883 = vadd.xlane.f32.xlu0 %v882
          %v884 = vpop.xlane.xlu0 %883
          %v885 = vadd.f32 %v881, %v884
          %v886 = vmul.f32 %v885, 0.03125
          %887 = vst.msk [vmem:[%s403] sm:$0xff] %vm599, %v886
        $region60: #{context_gen_forward.1} parent=51 // pred_fallthru
          _
        %p888 = scmp.lt.s32.totalorder %s32, 1
        %s889 = scalar_select %p888, %s32, 1
        %s890 = smul.addr %s889, 8
        %s891 = scalar_lea.vmem %s8, %s890
        %s892 = sand.u32 %s249, 1
        %s893 = scalar_lea.sflag [#allocation5], %s892
        %s894 = sand.u32 %s249, 1
        %s895 = smul.addr %s894, 16
        %s896 = scalar_lea.vmem [#allocation4], %s895
        %s897 = sand.u32 %s277, 1
        %s898 = scalar_lea.sflag [#allocation7], %s897
        %s899 = sand.u32 %s277, 1
        %s900 = smul.addr %s899, 16
        %s901 = scalar_lea.vmem [#allocation6], %s900
        // Predicated region
        $region61: #{context_gen_forward.1} parent=51 // pred_check
          %p902 = pneg %p233
        $region62: #{context_gen_forward.1} parent=51 // pred_check_branch
          %904 = sbr.rel (%p902) target = $region64
        $region63: #{context_gen_forward.1} parent=51 // pred_region
          _
        $region64: #{context_gen_forward.1} parent=51 // pred_fallthru
          _
        // Predicated region
        $region65: #{context_gen_forward.1} parent=51 // pred_check
          %p905 = pneg %p259
        $region66: #{context_gen_forward.1} parent=51 // pred_check_branch
          %907 = sbr.rel (%p905) target = $region68
        $region67: #{context_gen_forward.1} parent=51 // pred_region
          %s909 = ssub.s32 256, 256
          %910 = vsyncadd %s893, %s909
          %s911 = smul.addr %s32, 2
          %s912 = smul.addr %s911, 128
          %s913 = scalar_lea.hbm %s9, %s912
          %s914 = sshll.u32 %s896, 4
          %s915 = int_to_ptr.vmem [resolvable:$true] %s914
          %920 = dma.vmem_to_hbm [thread:$0]  %s915, 256, %s913, %s893, 128, 128, 8
        $region68: #{context_gen_forward.1} parent=51 // pred_fallthru
          _
        // Predicated region
        $region69: #{context_gen_forward.1} parent=51 // pred_check
          %p921 = pneg %p287
        $region70: #{context_gen_forward.1} parent=51 // pred_check_branch
          %923 = sbr.rel (%p921) target = $region72
        $region71: #{context_gen_forward.1} parent=51 // pred_region
          %s925 = ssub.s32 256, 256
          %926 = vsyncadd %s898, %s925
          %s927 = smul.addr %s32, 2
          %s928 = sadd.s32 %s33, %s927
          %s929 = smul.addr %s928, 128
          %s930 = scalar_lea.hbm %s10, %s929
          %s931 = sshll.u32 %s901, 4
          %s932 = int_to_ptr.vmem [resolvable:$true] %s931
          %937 = dma.vmem_to_hbm [thread:$0]  %s932, 256, %s930, %s898, 128, 128, 8
        $region72: #{context_gen_forward.1} parent=51 // pred_fallthru
          _
      $region52: #{context_gen_forward.1} parent=5 // pred_fallthru
        _
      %p938 = scmp.le.s32.totalorder 2, %s23
      // Predicated region
      $region73: #{context_gen_forward.1} parent=5 // pred_check
        %p939 = pneg %p938
      $region74: #{context_gen_forward.1} parent=5 // pred_check_branch
        %941 = sbr.rel (%p939) target = $region76
      $region75: #{context_gen_forward.1} parent=5 // pred_region
        %s942 = ssub.s32 %s23, 2
        // Predicated region
        $region77: #{context_gen_forward.1} parent=75 // pred_check
          %p943 = pneg %p239
        $region78: #{context_gen_forward.1} parent=75 // pred_check_branch
          %945 = sbr.rel (%p943) target = $region80
        $region79: #{context_gen_forward.1} parent=75 // pred_region
          %p946 = scmp.lt.s32.totalorder %s34, 1
          %s947 = scalar_select %p946, %s34, 1
          %s948 = smul.addr %s947, 8
          %s949 = scalar_lea.vmem %s8, %s948
        $region80: #{context_gen_forward.1} parent=75 // pred_fallthru
          _
        // Predicated region
        $region81: #{context_gen_forward.1} parent=75 // pred_check
          %p950 = pneg %p265
        $region82: #{context_gen_forward.1} parent=75 // pred_check_branch
          %952 = sbr.rel (%p950) target = $region84
        $region83: #{context_gen_forward.1} parent=75 // pred_region
          %s953 = sand.u32 %s250, 1
          %s954 = scalar_lea.sflag [#allocation5], %s953
          %s955 = sand.u32 %s250, 1
          %s956 = smul.addr %s955, 16
          %s957 = scalar_lea.vmem [#allocation4], %s956
          %958 = dma.done %s954, 256
        $region84: #{context_gen_forward.1} parent=75 // pred_fallthru
          _
        // Predicated region
        $region85: #{context_gen_forward.1} parent=75 // pred_check
          %p959 = pneg %p293
        $region86: #{context_gen_forward.1} parent=75 // pred_check_branch
          %961 = sbr.rel (%p959) target = $region88
        $region87: #{context_gen_forward.1} parent=75 // pred_region
          %s962 = sand.u32 %s278, 1
          %s963 = scalar_lea.sflag [#allocation7], %s962
          %s964 = sand.u32 %s278, 1
          %s965 = smul.addr %s964, 16
          %s966 = scalar_lea.vmem [#allocation6], %s965
          %967 = dma.done %s963, 256
        $region88: #{context_gen_forward.1} parent=75 // pred_fallthru
          _
      $region76: #{context_gen_forward.1} parent=5 // pred_fallthru
        _
    $region6: #{context_gen_forward.1} parent=1 // loop_footer
      %s27 = sadd.s32 1, %s23
    $region7: #{context_gen_forward.1} parent=1 // loop_footer_branch
      %22 = sbr.rel target = $region3
    $region8: #{context_gen_forward.1} parent=1 // loop_exit
      _
    %968 = vsyncpa [#allocation5], 1
    %s969 = scalar_lea.sflag [#allocation5], 1
    %970 = vsyncpa %s969, 1
    %971 = vsyncpa [#allocation7], 1
    %s972 = scalar_lea.sflag [#allocation7], 1
    %973 = vsyncpa %s972, 1

</llo_original>
